<compile_context>
chip_gen: v7x
topology: tpu7x:2x2x1
jax: 0.10.0
libtpu: 0.0.40
codegen_flags: <defaults>
</compile_context>

<pallas_src>
import functools

import jax
import jax.numpy as jnp
from jax.experimental import pallas as pl
from jax.experimental.pallas import tpu as pltpu

EPS = 1e-5

_TARGET_TILE_BYTES = 6 * 1024 * 1024    # per x tile (f32-equivalent budget)
_FUSED_MAX_BYTES = 4 * 1024 * 1024      # whole-x fused-path threshold
_VMEM_LIMIT_BYTES = 48 * 1024 * 1024    # safe on v5e/v6e (128 MiB) and v7x (64 MiB)


# --------------------------------------------------------------------------- #
# Kernels
# --------------------------------------------------------------------------- #
def _fused_kernel(x_ref, gamma_ref, beta_ref, o_ref, *, inv_count, eps):
    """Whole-array path: stats + normalize in one VMEM-resident kernel."""
    x = x_ref[...].astype(jnp.float32)                        # (N, C, L)
    s = jnp.sum(jnp.sum(x, axis=0), axis=-1, keepdims=True)   # (C, 1)
    q = jnp.sum(jnp.sum(x * x, axis=0), axis=-1, keepdims=True)
    mean = s * inv_count
    var = jnp.maximum(q * inv_count - mean * mean, 0.0)       # biased variance
    inv_std = jax.lax.rsqrt(var + eps)
    scale = gamma_ref[...] * inv_std                          # (C, 1)
    shift = beta_ref[...] - mean * scale                      # (C, 1)
    o_ref[...] = (x * scale[None, :, :] + shift[None, :, :]).astype(o_ref.dtype)


def _stats_kernel(x_ref, psum_ref, psq_ref, *, n_blk, l_blk, n_total, l_total,
                  mask_n, mask_l):
    """Pass 1: per-tile partial per-channel sum / sum-of-squares, shape (C, 1)."""
    x = x_ref[...].astype(jnp.float32)                        # (n_blk, C, l_blk)
    if mask_n or mask_l:
        mask = None
        if mask_n:
            row = jax.lax.broadcasted_iota(jnp.int32, (n_blk, 1, 1), 0)
            mask = row < (n_total - pl.program_id(0) * n_blk)
        if mask_l:
            lane = jax.lax.broadcasted_iota(jnp.int32, (1, 1, l_blk), 2)
            lmask = lane < (l_total - pl.program_id(1) * l_blk)
            mask = lmask if mask is None else jnp.logical_and(mask, lmask)
        x = jnp.where(mask, x, 0.0)
    s = jnp.sum(x, axis=0)                                    # (C, l_blk)
    q = jnp.sum(x * x, axis=0)                                # (C, l_blk)
    psum_ref[...] = jnp.sum(s, axis=-1, keepdims=True)        # (C, 1)
    psq_ref[...] = jnp.sum(q, axis=-1, keepdims=True)         # (C, 1)


def _apply_kernel(x_ref, scale_ref, shift_ref, o_ref):
    """Pass 2: y = x * scale + shift (per-channel FMA; scale/shift are (C, 1))."""
    scale = scale_ref[...][None, :, :]                        # (1, C, 1)
    shift = shift_ref[...][None, :, :]
    x = x_ref[...].astype(jnp.float32)                        # (n_blk, C, l_blk)
    o_ref[...] = (x * scale + shift).astype(o_ref.dtype)


# --------------------------------------------------------------------------- #
# Wrapper
# --------------------------------------------------------------------------- #
def _choose_tiles(N, C, L, itemsize):
    size = max(itemsize, 4)              # budget in f32-equivalent bytes
    row_bytes = max(1, C * L * size)
    if row_bytes <= _TARGET_TILE_BYTES:
        l_blk = L
        n_blk = max(1, min(N, _TARGET_TILE_BYTES // row_bytes))
    else:
        n_blk = 1
        lanes = _TARGET_TILE_BYTES // max(1, C * size)
        l_blk = max(128, (lanes // 128) * 128)                # lane multiple of 128
        l_blk = min(l_blk, L)                                 # or the full extent
    num_n = pl.cdiv(N, n_blk)
    num_l = pl.cdiv(L, l_blk)
    # Guarantee >= 2 grid points so the "parallel" axes shard across v7x's 2 TCs.
    if num_n * num_l < 2:
        if N >= 2:
            n_blk = pl.cdiv(N, 2)
        elif L >= 256:
            l_blk = ((pl.cdiv(L, 2) + 127) // 128) * 128
        num_n = pl.cdiv(N, n_blk)
        num_l = pl.cdiv(L, l_blk)
    return n_blk, l_blk, num_n, num_l


def _bn_train_3d(x, gamma, beta, force_two_pass):
    N, C, L = x.shape
    itemsize = jnp.dtype(x.dtype).itemsize
    total_bytes = N * C * L * itemsize
    inv_count = 1.0 / float(N * L)
    g2d = gamma.reshape(C, 1).astype(jnp.float32)
    b2d = beta.reshape(C, 1).astype(jnp.float32)

    # ---------------- Fused single-call fast path -------------------------- #
    if total_bytes <= _FUSED_MAX_BYTES and not force_two_pass:
        fused = functools.partial(_fused_kernel, inv_count=inv_count, eps=EPS)
        return pl.pallas_call(
            fused,
            out_shape=jax.ShapeDtypeStruct((N, C, L), x.dtype),
            grid_spec=pltpu.PrefetchScalarGridSpec(
                num_scalar_prefetch=0,
                grid=(1,),
                in_specs=[pl.BlockSpec((N, C, L), lambda i: (0, 0, 0)),
                          pl.BlockSpec((C, 1), lambda i: (0, 0)),
                          pl.BlockSpec((C, 1), lambda i: (0, 0))],
                out_specs=pl.BlockSpec((N, C, L), lambda i: (0, 0, 0))),
            compiler_params=pltpu.CompilerParams(
                dimension_semantics=("arbitrary",),
                vmem_limit_bytes=_VMEM_LIMIT_BYTES),
            cost_estimate=pl.CostEstimate(
                flops=5 * N * C * L,
                transcendentals=C,
                bytes_accessed=2 * N * C * L * itemsize),
        )(x, g2d, b2d)

    # ---------------- Two-pass tiled path ----------------------------------- #
    n_blk, l_blk, num_n, num_l = _choose_tiles(N, C, L, itemsize)
    mask_n = (N % n_blk) != 0
    mask_l = (L % l_blk) != 0

    stats = functools.partial(
        _stats_kernel, n_blk=n_blk, l_blk=l_blk, n_total=N, l_total=L,
        mask_n=mask_n, mask_l=mask_l)

    # Pass 1: independent per-tile partial sums (both grid axes "parallel").
    psum, psq = pl.pallas_call(
        stats,
        out_shape=(jax.ShapeDtypeStruct((num_n, num_l, C, 1), jnp.float32),
                   jax.ShapeDtypeStruct((num_n, num_l, C, 1), jnp.float32)),
        grid_spec=pltpu.PrefetchScalarGridSpec(
            num_scalar_prefetch=0,
            grid=(num_n, num_l),
            in_specs=[pl.BlockSpec((n_blk, C, l_blk), lambda i, j: (i, 0, j))],
            out_specs=(
                pl.BlockSpec((None, None, C, 1), lambda i, j: (i, j, 0, 0)),
                pl.BlockSpec((None, None, C, 1), lambda i, j: (i, j, 0, 0)),
            )),
        compiler_params=pltpu.CompilerParams(
            dimension_semantics=("parallel", "parallel"),
            vmem_limit_bytes=_VMEM_LIMIT_BYTES),
        cost_estimate=pl.CostEstimate(
            flops=3 * N * C * L,
            transcendentals=0,
            bytes_accessed=N * C * L * itemsize + 8 * num_n * num_l * C),
    )(x)

    # Tiny per-channel epilogue (C elements) in plain JAX: fold mean/var/affine.
    tot_sum = jnp.sum(psum, axis=(0, 1))                      # (C, 1)
    tot_sq = jnp.sum(psq, axis=(0, 1))                        # (C, 1)
    mean = tot_sum * inv_count
    var = jnp.maximum(tot_sq * inv_count - mean * mean, 0.0)  # biased variance
    inv_std = jax.lax.rsqrt(var + EPS)
    scale = g2d * inv_std                                     # (C, 1)
    shift = b2d - mean * scale                                # (C, 1)

    # Pass 2: normalize (fully parallel, lane-dense output blocks).
    y = pl.pallas_call(
        _apply_kernel,
        out_shape=jax.ShapeDtypeStruct((N, C, L), x.dtype),
        grid_spec=pltpu.PrefetchScalarGridSpec(
            num_scalar_prefetch=0,
            grid=(num_n, num_l),
            in_specs=[pl.BlockSpec((n_blk, C, l_blk), lambda i, j: (i, 0, j)),
                      pl.BlockSpec((C, 1), lambda i, j: (0, 0)),
                      pl.BlockSpec((C, 1), lambda i, j: (0, 0))],
            out_specs=pl.BlockSpec((n_blk, C, l_blk), lambda i, j: (i, 0, j))),
        compiler_params=pltpu.CompilerParams(
            dimension_semantics=("parallel", "parallel"),
            vmem_limit_bytes=_VMEM_LIMIT_BYTES),
        cost_estimate=pl.CostEstimate(
            flops=2 * N * C * L,
            transcendentals=0,
            bytes_accessed=2 * N * C * L * itemsize),
    )(x, scale, shift)
    return y


@functools.partial(jax.jit, static_argnames=("force_two_pass",))
def batch_norm_1d(x, gamma, beta, force_two_pass=False):
    """Training-mode BatchNorm1d forward.  x: (N, C) or (N, C, L)."""
    # TODO(synk): running_mean / running_var momentum updates (stateful PyTorch
    # buffers) are not modeled; only the forward normalization is computed.
    if x.ndim == 2:
        return _bn_train_3d(x[:, :, None], gamma, beta, force_two_pass)[:, :, 0]
    return _bn_train_3d(x, gamma, beta, force_two_pass)


# --------------------------------------------------------------------------- #
# Demo / self-check
# --------------------------------------------------------------------------- #
if __name__ == "__main__":
    key = jax.random.PRNGKey(0)
    N, C, L = 2, 4, 16  # small shapes consistent with BatchNorm1d(num_features=4)
    x = jax.random.normal(key, (N, C, L), dtype=jnp.float32)

    # Parameters matching nn.BatchNorm1d defaults (weight=1, bias=0).
    gamma = jnp.ones((C,), dtype=jnp.float32)
    beta = jnp.zeros((C,), dtype=jnp.float32)

    # Pure-JAX reference (training-mode BatchNorm1d semantics, biased variance).
    mean = jnp.mean(x, axis=(0, 2), keepdims=True)
    var = jnp.mean((x - mean) ** 2, axis=(0, 2), keepdims=True)
    y_ref = (x - mean) / jnp.sqrt(var + EPS) * gamma[None, :, None] + beta[None, :, None]

    # Fused (fast-path) kernel.
    y = jax.block_until_ready(batch_norm_1d(x, gamma, beta))
    assert jnp.max(jnp.abs(y - y_ref)) < 1e-4, "fused-path mismatch vs reference"

    # Also exercise the tiled two-pass path on the same small input.
    y2 = jax.block_until_ready(batch_norm_1d(x, gamma, beta, force_two_pass=True))
    assert jnp.max(jnp.abs(y2 - y_ref)) < 1e-4, "two-pass mismatch vs reference"

    print("KERNEL_OK")
</pallas_src>

<mosaic_0001>
module attributes {stable_mosaic.version = 11 : i64} {
  func.func @_fused_kernel(%arg0: i32, %arg1: memref<2x4x16xf32, #tpu.memory_space<vmem>>, %arg2: memref<4x1xf32, #tpu.memory_space<vmem>>, %arg3: memref<4x1xf32, #tpu.memory_space<vmem>>, %arg4: memref<2x4x16xf32, #tpu.memory_space<vmem>>) attributes {dimension_semantics = [#tpu.dimension_semantics<arbitrary>], iteration_bounds = array<i64: 1>, scalar_prefetch = 0 : i64, scratch_operands = 0 : i64, tpu.core_type = #tpu.core_type<tc>, window_params = [{pipeline_mode = #tpu.pipeline_mode<synchronous>, transform_indices = @transform_0, window_bounds = array<i64: 2, 4, 16>}, {pipeline_mode = #tpu.pipeline_mode<synchronous>, transform_indices = @transform_1, window_bounds = array<i64: 4, 1>}, {pipeline_mode = #tpu.pipeline_mode<synchronous>, transform_indices = @transform_2, window_bounds = array<i64: 4, 1>}, {pipeline_mode = #tpu.pipeline_mode<synchronous>, transform_indices = @transform_3, window_bounds = array<i64: 2, 4, 16>}]} {
    %c0 = arith.constant 0 : index
    %c0_0 = arith.constant 0 : index
    %c0_1 = arith.constant 0 : index
    %0 = vector.load %arg1[%c0, %c0_0, %c0_1] : memref<2x4x16xf32, #tpu.memory_space<vmem>>, vector<2x4x16xf32>
    %cst = arith.constant dense<0.000000e+00> : vector<4x16xf32>
    %1 = vector.multi_reduction <add>, %0, %cst [0] : vector<2x4x16xf32> to vector<4x16xf32>
    %cst_2 = arith.constant dense<0.000000e+00> : vector<4xf32>
    %2 = vector.multi_reduction <add>, %1, %cst_2 [1] : vector<4x16xf32> to vector<4xf32>
    %3 = vector.shape_cast %2 : vector<4xf32> to vector<4x1xf32>
    %4 = arith.mulf %0, %0 : vector<2x4x16xf32>
    %cst_3 = arith.constant dense<0.000000e+00> : vector<4x16xf32>
    %5 = vector.multi_reduction <add>, %4, %cst_3 [0] : vector<2x4x16xf32> to vector<4x16xf32>
    %cst_4 = arith.constant dense<0.000000e+00> : vector<4xf32>
    %6 = vector.multi_reduction <add>, %5, %cst_4 [1] : vector<4x16xf32> to vector<4xf32>
    %7 = vector.shape_cast %6 : vector<4xf32> to vector<4x1xf32>
    %cst_5 = arith.constant 3.125000e-02 : f32
    %8 = vector.broadcast %cst_5 : f32 to vector<4x1xf32>
    %9 = arith.mulf %3, %8 : vector<4x1xf32>
    %cst_6 = arith.constant 3.125000e-02 : f32
    %10 = vector.broadcast %cst_6 : f32 to vector<4x1xf32>
    %11 = arith.mulf %7, %10 : vector<4x1xf32>
    %12 = arith.mulf %9, %9 : vector<4x1xf32>
    %13 = arith.subf %11, %12 : vector<4x1xf32>
    %cst_7 = arith.constant 0.000000e+00 : f32
    %14 = vector.broadcast %cst_7 : f32 to vector<4x1xf32>
    %15 = arith.maximumf %13, %14 : vector<4x1xf32>
    %cst_8 = arith.constant 9.99999974E-6 : f32
    %16 = vector.broadcast %cst_8 : f32 to vector<4x1xf32>
    %17 = arith.addf %15, %16 : vector<4x1xf32>
    %18 = math.rsqrt %17 : vector<4x1xf32>
    %c0_9 = arith.constant 0 : index
    %c0_10 = arith.constant 0 : index
    %19 = vector.load %arg2[%c0_9, %c0_10] : memref<4x1xf32, #tpu.memory_space<vmem>>, vector<4x1xf32>
    %20 = arith.mulf %19, %18 : vector<4x1xf32>
    %c0_11 = arith.constant 0 : index
    %c0_12 = arith.constant 0 : index
    %21 = vector.load %arg3[%c0_11, %c0_12] : memref<4x1xf32, #tpu.memory_space<vmem>>, vector<4x1xf32>
    %22 = arith.mulf %9, %20 : vector<4x1xf32>
    %23 = arith.subf %21, %22 : vector<4x1xf32>
    %24 = vector.shape_cast %20 : vector<4x1xf32> to vector<1x4x1xf32>
    %25 = vector.broadcast %24 : vector<1x4x1xf32> to vector<2x4x16xf32>
    %26 = arith.mulf %0, %25 : vector<2x4x16xf32>
    %27 = vector.shape_cast %23 : vector<4x1xf32> to vector<1x4x1xf32>
    %28 = vector.broadcast %27 : vector<1x4x1xf32> to vector<2x4x16xf32>
    %29 = arith.addf %26, %28 : vector<2x4x16xf32>
    %c0_13 = arith.constant 0 : index
    %c0_14 = arith.constant 0 : index
    %c0_15 = arith.constant 0 : index
    %30 = vector.load %arg4[%c0_13, %c0_14, %c0_15] : memref<2x4x16xf32, #tpu.memory_space<vmem>>, vector<2x4x16xf32>
    tpu.vector_store %arg4[%c0_13, %c0_14, %c0_15], %29 {strides = array<i32>} : memref<2x4x16xf32, #tpu.memory_space<vmem>>, vector<2x4x16xf32>,
    return
  }
  func.func @transform_0(%arg0: i32) -> (i32, i32, i32) {
    %c0_i32 = arith.constant 0 : i32
    %c0_i32_0 = arith.constant 0 : i32
    %c0_i32_1 = arith.constant 0 : i32
    %c0_i32_2 = arith.constant 0 : i32
    return %c0_i32, %c0_i32_0, %c0_i32_1 : i32, i32, i32
  }
  func.func @transform_1(%arg0: i32) -> (i32, i32) {
    %c0_i32 = arith.constant 0 : i32
    %c0_i32_0 = arith.constant 0 : i32
    %c0_i32_1 = arith.constant 0 : i32
    return %c0_i32, %c0_i32_0 : i32, i32
  }
  func.func @transform_2(%arg0: i32) -> (i32, i32) {
    %c0_i32 = arith.constant 0 : i32
    %c0_i32_0 = arith.constant 0 : i32
    %c0_i32_1 = arith.constant 0 : i32
    return %c0_i32, %c0_i32_0 : i32, i32
  }
  func.func @transform_3(%arg0: i32) -> (i32, i32, i32) {
    %c0_i32 = arith.constant 0 : i32
    %c0_i32_0 = arith.constant 0 : i32
    %c0_i32_1 = arith.constant 0 : i32
    %c0_i32_2 = arith.constant 0 : i32
    return %c0_i32, %c0_i32_0, %c0_i32_1 : i32, i32, i32
  }
}

</mosaic_0001>

<llo_original>
// kernel: batch_norm_1d.1
$region0: #{batch_norm_1d.1}
  #allocation0 [shape = 'u32[]', space=smem, size = 0x4, offset = 0x4, fixed_abs, tag = 'smem constant byte address 0x4 - core index']
  #allocation1 [shape = 'u32[144,128]{1,0:T(1,128)}', space=vmem, size = 0x12000, scoped, tag = 'internal scratch']
  %s0 = inlined_call_operand.vmem [shape: f32[2,4,16], index: 0, kind: input, shape index: {}]
  %s1 = inlined_call_operand.vmem [shape: f32[4,1], index: 1, kind: input, shape index: {}]
  %s2 = inlined_call_operand.vmem [shape: f32[4,1], index: 2, kind: input, shape index: {}]
  %s3 = inlined_call_operand.hbm [shape: f32[2,4,16], index: 3, kind: output, shape index: {}]
  %s4 = sld [smem:[#allocation0]]
  $region22: #{batch_norm_1d.1} parent=0
    _
  %s6 = ssub.s32 1, %s4
  %s7 = scalar_select 0, %s6, %s4
  $region1: #{batch_norm_1d.1} parent=0
    #allocation2 [shape = 'u8[4096]{0}', space=vmem, size = 0x1000, scoped, tag = 'output window, operand 0, single buffered']
    #allocation3 [shape = 's32[1]{0}', space=sflag, size = 0x4, scoped, tag = 'scoped memory for batch_norm_1d.1']
    %8 = vsyncpa [#allocation3], 0
    // Predicated region
    $region2: #{batch_norm_1d.1} parent=1 // pred_check
      _
    $region3: #{batch_norm_1d.1} parent=1 // pred_check_branch
      %10 = sbr.rel (0) target = $region5
    $region4: #{batch_norm_1d.1} parent=1 // pred_region
      _
    $region5: #{batch_norm_1d.1} parent=1 // pred_fallthru
      _
    // Predicated region
    $region6: #{batch_norm_1d.1} parent=1 // pred_check
      _
    $region7: #{batch_norm_1d.1} parent=1 // pred_check_branch
      %12 = sbr.rel (0) target = $region9
    $region8: #{batch_norm_1d.1} parent=1 // pred_region
      _
    $region9: #{batch_norm_1d.1} parent=1 // pred_fallthru
      _
    // Predicated region
    $region10: #{batch_norm_1d.1} parent=1 // pred_check
      _
    $region11: #{batch_norm_1d.1} parent=1 // pred_check_branch
      %14 = sbr.rel (0) target = $region13
    $region12: #{batch_norm_1d.1} parent=1 // pred_region
      _
    $region13: #{batch_norm_1d.1} parent=1 // pred_fallthru
      _
    %v15 = vld [vmem:[%s0] sm:$0xf]
    %v16 = vld [vmem:[%s0 + $0x4] sm:$0xf]
    %vm17 = vcmask 125952
    %v18 = vsel %vm17, %v15, 0.0
    %v19 = vsel %vm17, %v16, 0.0
    %v20 = vadd.f32 %v18, %v19
    %v21 = vsel %vm17, %v20, 0.0
    %22 = vadd.xlane.f32.xlu0 %v21
    %v23 = vpop.xlane.xlu0 %22
    %v24 = vmul.f32 %v15, %v15
    %v25 = vmul.f32 %v16, %v16
    %v26 = vsel %vm17, %v24, 0.0
    %v27 = vsel %vm17, %v25, 0.0
    %v28 = vadd.f32 %v26, %v27
    %v29 = vsel %vm17, %v28, 0.0
    %30 = vadd.xlane.f32.xlu0 %v29
    %v31 = vpop.xlane.xlu0 %30
    %v32 = vmul.f32 %v23, 0.03125
    %v33 = vmul.f32 %v31, 0.03125
    %v34 = vmul.f32 %v32, %v32
    %v35 = vsub.f32 %v33, %v34
    %v36 = vmax.f32 %v35, 0.0
    %v37 = vadd.f32 %v36, 1e-05
    %v38 = vrsqrt.pop %v37
    %v39 = vld [vmem:[%s1] sm:$0xf]
    %v40 = vmul.f32 %v39, %v38
    %v41 = vld [vmem:[%s2] sm:$0xf]
    %v42 = vmul.f32 %v32, %v40
    %v43 = vsub.f32 %v41, %v42
    %45 = vset.pattern.permute.xlu0 0
    %46 = vperm.xlu0 %45, %v40
    %v47 = vpop.permute.xlu0 %46
    %v49 = vmul.f32 %v15, %v47
    %v50 = vmul.f32 %v16, %v47
    %52 = vset.pattern.permute.xlu0 0
    %53 = vperm.xlu0 %52, %v43
    %v54 = vpop.permute.xlu0 %53
    %v56 = vadd.f32 %v49, %v54
    %v57 = vadd.f32 %v50, %v54
    %58 = vst.msk [vmem:[#allocation2] sm:$0xf] %vm17, %v56
    %59 = vst.msk [vmem:[#allocation2 + $0x4] sm:$0xf] %vm17, %v57
    // Predicated region
    $region14: #{batch_norm_1d.1} parent=1 // pred_check
      _
    $region15: #{batch_norm_1d.1} parent=1 // pred_check_branch
      %61 = sbr.rel (0) target = $region17
    $region16: #{batch_norm_1d.1} parent=1 // pred_region
      %s63 = ssub.s32 128, 128
      %64 = vsyncadd [#allocation3], %s63
      %s65 = sshll.u32 [#allocation2], 4
      %s66 = int_to_ptr.vmem [resolvable:$true] %s65
      %71 = dma.vmem_to_hbm [thread:$0]  %s66, 128, %s3, [#allocation3], 64, 64, 4
    $region17: #{batch_norm_1d.1} parent=1 // pred_fallthru
      _
    // Predicated region
    $region18: #{batch_norm_1d.1} parent=1 // pred_check
      _
    $region19: #{batch_norm_1d.1} parent=1 // pred_check_branch
      %73 = sbr.rel (0) target = $region21
    $region20: #{batch_norm_1d.1} parent=1 // pred_region
      %74 = dma.done [#allocation3], 128
    $region21: #{batch_norm_1d.1} parent=1 // pred_fallthru
      _
    %75 = vsyncpa [#allocation3], 1

</llo_original>
